<compile_context>
chip_gen: v6e
topology: v6e:2x2x1
jax: 0.10.0
libtpu: 0.0.40
codegen_flags: <defaults>
</compile_context>

<pallas_src>
import jax
import jax.numpy as jnp
from jax.experimental import pallas as pl
from jax.experimental.pallas import tpu as pltpu

# SELU constants (match torch.nn.SELU)
_SELU_ALPHA = 1.6732632423543772
_SELU_SCALE = 1.0507009873554805


def _residual_selu_kernel(x_ref, o_ref):
    # Upcast to f32 so exp() is done at full precision even for bf16 inputs.
    x = x_ref[...].astype(jnp.float32)
    y = x + x  # blocks(x) + residual, both Identity
    # SELU(y) = scale * ( y            if y > 0
    #                     alpha*(e^y-1) otherwise )
    neg = jnp.minimum(y, 0.0)  # clamp so exp never overflows in the dead branch
    selu = jnp.where(
        y > 0.0,
        _SELU_SCALE * y,
        (_SELU_SCALE * _SELU_ALPHA) * (jnp.exp(neg) - 1.0),
    )
    o_ref[...] = selu.astype(o_ref.dtype)


def _round_up(x, m):
    return (x + m - 1) // m * m


def residual_block_forward(x, in_channels, out_channels, activation="selu"):
    """Pallas implementation of ResidualBlock.forward for NCHW input x."""
    assert activation == "selu", "only 'selu' implemented (module default)"
    N, C, H, W = x.shape
    assert C == in_channels
    orig_dtype = x.dtype
    total = N * C * H * W

    # Lane-dense layout: wide last dim when the tensor is big enough to amortize
    # padding, otherwise plain 128 lanes.
    LANES = 512 if total >= 512 * 16 else 128
    # ~1 MiB f32 per block (0.5 MiB for bf16). With double-buffered in+out that is
    # ~4 MiB of VMEM — well under the v5e 16 MiB scoped default and v7x's 64 MiB.
    TILE_ROWS = max(16, (1 << 20) // (LANES * 4))

    rows_needed = pl.cdiv(total, LANES)
    if rows_needed <= TILE_ROWS:
        # Single block: keep it sublane-aligned (multiple of 16 covers f32 & bf16).
        rows = _round_up(rows_needed, 16)
        tile_rows = rows
    else:
        # Many blocks: pad rows so the fixed tile divides exactly (no edge masking).
        rows = _round_up(rows_needed, TILE_ROWS)
        tile_rows = TILE_ROWS

    padded_total = rows * LANES
    x_flat = x.reshape(-1)
    if padded_total != total:
        x_flat = jnp.pad(x_flat, (0, padded_total - total))
    x2d = x_flat.reshape(rows, LANES)

    grid = (rows // tile_rows,)

    out2d = pl.pallas_call(
        _residual_selu_kernel,
        out_shape=jax.ShapeDtypeStruct((rows, LANES), orig_dtype),
        grid_spec=pltpu.PrefetchScalarGridSpec(
            num_scalar_prefetch=0,
            grid=grid,
            in_specs=[pl.BlockSpec((tile_rows, LANES), lambda i: (i, 0))],
            out_specs=pl.BlockSpec((tile_rows, LANES), lambda i: (i, 0)),
        ),
        compiler_params=pltpu.CompilerParams(
            dimension_semantics=("parallel",),
        ),
    )(x2d)

    out_flat = out2d.reshape(-1)
    if padded_total != total:
        out_flat = out_flat[:total]
    return out_flat.reshape(N, C, H, W)


def _reference(x):
    # pure-JAX reference matching torch semantics
    y = (x.astype(jnp.float32)) * 2.0
    r = _SELU_SCALE * jnp.where(y > 0, y, _SELU_ALPHA * (jnp.exp(y) - 1.0))
    return r.astype(x.dtype)


if __name__ == "__main__":
    key = jax.random.PRNGKey(0)

    # Primary shape from the module's intended use (small, NCHW).
    shapes = [
        (2, 4, 16, 16),   # lane-exact path (2048 elems)
        (4, 8, 32, 32),   # wide-lane (512) path, exactly divisible
        (2, 3, 15, 17),   # padding path (1530 elems, not a multiple of 128)
    ]

    for idx, (N, C, H, W) in enumerate(shapes):
        key, sub = jax.random.split(key)
        x = jax.random.normal(sub, (N, C, H, W), dtype=jnp.float32)

        out = residual_block_forward(x, in_channels=C, out_channels=C,
                                     activation="selu")
        out = jax.block_until_ready(out)

        ref = _reference(x)
        assert out.shape == x.shape and out.dtype == x.dtype
        assert jnp.allclose(out, ref, atol=1e-5, rtol=1e-5), f"mismatch at shape {x.shape}"

    print("KERNEL_OK")
</pallas_src>

<mosaic_0001>
module attributes {stable_mosaic.version = 11 : i64} {
  func.func @_residual_selu_kernel(%arg0: i32, %arg1: memref<16x128xf32, #tpu.memory_space<vmem>>, %arg2: memref<16x128xf32, #tpu.memory_space<vmem>>) attributes {dimension_semantics = [#tpu.dimension_semantics<parallel>], iteration_bounds = array<i64: 1>, scalar_prefetch = 0 : i64, scratch_operands = 0 : i64, tpu.core_type = #tpu.core_type<tc>, window_params = [{transform_indices = @transform_0, window_bounds = array<i64: 16, 128>}, {transform_indices = @transform_1, window_bounds = array<i64: 16, 128>}]} {
    %c0 = arith.constant 0 : index
    %c0_0 = arith.constant 0 : index
    %0 = vector.load %arg1[%c0, %c0_0] : memref<16x128xf32, #tpu.memory_space<vmem>>, vector<16x128xf32>
    %1 = arith.addf %0, %0 : vector<16x128xf32>
    %cst = arith.constant 0.000000e+00 : f32
    %2 = vector.broadcast %cst : f32 to vector<16x128xf32>
    %3 = arith.minimumf %1, %2 : vector<16x128xf32>
    %cst_1 = arith.constant 0.000000e+00 : f32
    %4 = vector.broadcast %cst_1 : f32 to vector<16x128xf32>
    %5 = arith.cmpf ogt, %1, %4 : vector<16x128xf32>
    %cst_2 = arith.constant 1.05070102 : f32
    %6 = vector.broadcast %cst_2 : f32 to vector<16x128xf32>
    %7 = arith.mulf %6, %1 : vector<16x128xf32>
    %8 = math.exp %3 : vector<16x128xf32>
    %cst_3 = arith.constant 1.000000e+00 : f32
    %9 = vector.broadcast %cst_3 : f32 to vector<16x128xf32>
    %10 = arith.subf %8, %9 : vector<16x128xf32>
    %cst_4 = arith.constant 1.75809932 : f32
    %11 = vector.broadcast %cst_4 : f32 to vector<16x128xf32>
    %12 = arith.mulf %11, %10 : vector<16x128xf32>
    %13 = arith.select %5, %7, %12 : vector<16x128xi1>, vector<16x128xf32>
    %c0_5 = arith.constant 0 : index
    %c0_6 = arith.constant 0 : index
    %14 = vector.load %arg2[%c0_5, %c0_6] : memref<16x128xf32, #tpu.memory_space<vmem>>, vector<16x128xf32>
    tpu.vector_store %arg2[%c0_5, %c0_6], %13 {strides = array<i32>} : memref<16x128xf32, #tpu.memory_space<vmem>>, vector<16x128xf32>,
    return
  }
  func.func @transform_0(%arg0: i32) -> (i32, i32) {
    %c0_i32 = arith.constant 0 : i32
    %c0_i32_0 = arith.constant 0 : i32
    return %arg0, %c0_i32 : i32, i32
  }
  func.func @transform_1(%arg0: i32) -> (i32, i32) {
    %c0_i32 = arith.constant 0 : i32
    %c0_i32_0 = arith.constant 0 : i32
    return %arg0, %c0_i32 : i32, i32
  }
}

</mosaic_0001>

<llo_original>
// kernel: tpu_custom_call.1
$region0: #{tpu_custom_call.1}
  #allocation0 [shape = 'u32[]', space=smem, size = 0x4, offset = 0x4, fixed_abs, tag = 'smem constant byte address 0x4 - core index']
  #allocation1 [shape = 'u32[144,128]{1,0:T(1,128)}', space=vmem, size = 0x12000, scoped, tag = 'internal scratch']
  %s0 = inlined_call_operand.hbm [shape: f32[16,128], index: 0, kind: input, shape index: {}]
  %s1 = inlined_call_operand.hbm [shape: f32[16,128], index: 1, kind: output, shape index: {}]
  %s2 = sld [smem:[#allocation0]]
  $region18: #{tpu_custom_call.1} parent=0
    _
  %s4 = ssub.s32 1, %s2
  %s5 = scalar_select 0, %s4, %s2
  $region1: #{tpu_custom_call.1} parent=0
    #allocation2 [shape = 'u8[8192]{0}', space=vmem, size = 0x2000, scoped, tag = 'input window, operand 0, single buffered']
    #allocation3 [shape = 's32[1]{0}', space=sflag, size = 0x4, scoped, tag = 'scoped memory for tpu_custom_call.1']
    #allocation4 [shape = 's32[1]{0}', space=sflag, size = 0x4, scoped, tag = 'scoped memory for tpu_custom_call.1']
    #allocation5 [shape = 'u8[8192]{0}', space=vmem, size = 0x2000, scoped, tag = 'output window, operand 0, single buffered']
    %6 = vsyncpa [#allocation3], 0
    %7 = vsyncpa [#allocation4], 0
    // Predicated region
    $region2: #{tpu_custom_call.1} parent=1 // pred_check
      _
    $region3: #{tpu_custom_call.1} parent=1 // pred_check_branch
      %9 = sbr.rel (0) target = $region5
    $region4: #{tpu_custom_call.1} parent=1 // pred_region
      %s11 = ssub.s32 256, 256
      %12 = vsyncadd [#allocation3], %s11
      %s13 = sshll.u32 [#allocation2], 4
      %s14 = int_to_ptr.vmem [resolvable:$true] %s13
      %19 = dma.hbm_to_vmem [thread:$0]  %s0, 256, %s14, [#allocation3], 128, 128, 8
    $region5: #{tpu_custom_call.1} parent=1 // pred_fallthru
      _
    // Predicated region
    $region6: #{tpu_custom_call.1} parent=1 // pred_check
      _
    $region7: #{tpu_custom_call.1} parent=1 // pred_check_branch
      %21 = sbr.rel (0) target = $region9
    $region8: #{tpu_custom_call.1} parent=1 // pred_region
      %22 = dma.done [#allocation3], 256
    $region9: #{tpu_custom_call.1} parent=1 // pred_fallthru
      _
    %v23 = vld [vmem:[#allocation2] sm:$0xff]
    %v24 = vld [vmem:[#allocation2 + $0x8] sm:$0xff]
    %v25 = vadd.f32 %v23, %v23
    %v26 = vadd.f32 %v24, %v24
    %v27 = vmin.f32 %v25, 0.0
    %v28 = vmin.f32 %v26, 0.0
    %vm29 = vcmp.gt.f32.partialorder %v25, 0.0
    %vm30 = vcmp.gt.f32.partialorder %v26, 0.0
    %v31 = vmul.f32 %v25, 1.050701
    %v32 = vmul.f32 %v26, 1.050701
    %v33 = vmul.f32 %v27, 1.442695
    %v34 = vpow.pop %v33
    %v35 = vmul.f32 %v28, 1.442695
    %v36 = vpow.pop %v35
    %v37 = vsub.f32 %v34, 1.0
    %v38 = vsub.f32 %v36, 1.0
    %v39 = vmul.f32 %v37, 1.7580993
    %v40 = vmul.f32 %v38, 1.7580993
    %v41 = vsel %vm29, %v31, %v39
    %v42 = vsel %vm30, %v32, %v40
    %43 = vst [vmem:[#allocation5] sm:$0xff] %v41
    %44 = vst [vmem:[#allocation5 + $0x8] sm:$0xff] %v42
    // Predicated region
    $region10: #{tpu_custom_call.1} parent=1 // pred_check
      _
    $region11: #{tpu_custom_call.1} parent=1 // pred_check_branch
      %46 = sbr.rel (0) target = $region13
    $region12: #{tpu_custom_call.1} parent=1 // pred_region
      %s48 = ssub.s32 256, 256
      %49 = vsyncadd [#allocation4], %s48
      %s50 = sshll.u32 [#allocation5], 4
      %s51 = int_to_ptr.vmem [resolvable:$true] %s50
      %56 = dma.vmem_to_hbm [thread:$0]  %s51, 256, %s1, [#allocation4], 128, 128, 8
    $region13: #{tpu_custom_call.1} parent=1 // pred_fallthru
      _
    // Predicated region
    $region14: #{tpu_custom_call.1} parent=1 // pred_check
      _
    $region15: #{tpu_custom_call.1} parent=1 // pred_check_branch
      %58 = sbr.rel (0) target = $region17
    $region16: #{tpu_custom_call.1} parent=1 // pred_region
      %59 = dma.done [#allocation4], 256
    $region17: #{tpu_custom_call.1} parent=1 // pred_fallthru
      _
    %60 = vsyncpa [#allocation3], 1
    %61 = vsyncpa [#allocation4], 1

</llo_original>
